<compile_context>
chip_gen: v6e
topology: v6e:2x2x1
jax: 0.10.0
libtpu: 0.0.40
codegen_flags: <defaults>
</compile_context>

<pallas_src>
import jax
import jax.numpy as jnp
from jax.experimental import pallas as pl
from jax.experimental.pallas import tpu as pltpu

DIM = 32            # ODE state dimension used in the demo
HIDDEN = 50         # hidden width from the PyTorch module
HIDDEN_PAD = 64     # hidden width padded to an exact sublane multiple
SUBLANE = 8
MAX_BM = 4096       # max batch (sublane) tile per grid step
SPLIT_BATCH = 1024  # batches >= this get >= 2 grid steps (v7x megacore / pipelining)


def _ceil_to(x, m):
    return -(-x // m) * m


def _tiling(batch):
    """Pick (padded_batch, batch_tile, grid_steps)."""
    pb = _ceil_to(batch, SUBLANE)
    steps = max(1, pl.cdiv(pb, MAX_BM))
    if steps == 1 and pb >= SPLIT_BATCH:
        steps = 2  # guarantee >=2 steps for big batches: megacore + DMA/compute overlap
    bm = _ceil_to(pl.cdiv(pb, steps), SUBLANE)
    pb = steps * bm
    return pb, bm, steps


def odefunc_kernel(y_ref, w1_ref, b1_ref, w2_ref, b2_ref, w3_ref, b3_ref, o_ref):
    # y_ref: (bm, dim) f32 — batch on sublanes, state dim on lanes (natural layout).
    # w*_ref: pre-transposed (in, out) weights in compute dtype (bf16 or f32).
    # b*_ref: (1, out) f32 rows, broadcast across the batch (sublane) axis.
    cdt = w1_ref.dtype
    y = y_ref[...]
    # Layer 1: (bm, dim) @ (dim, 64) -> f32 acc, f32 bias add + tanh.
    h1 = jnp.tanh(
        jnp.dot(y.astype(cdt), w1_ref[...], preferred_element_type=jnp.float32)
        + b1_ref[...]
    )
    # Layer 2: (bm, 64) @ (64, 64).
    h2 = jnp.tanh(
        jnp.dot(h1.astype(cdt), w2_ref[...], preferred_element_type=jnp.float32)
        + b2_ref[...]
    )
    # Layer 3: (bm, 64) @ (64, dim), no activation.
    out = (
        jnp.dot(h2.astype(cdt), w3_ref[...], preferred_element_type=jnp.float32)
        + b3_ref[...]
    )
    o_ref[...] = out.astype(o_ref.dtype)


def odefunc_forward(t, y, params):
    """Pallas implementation of ODEFunc.forward(t, y) = net(y). `t` is unused,
    matching the PyTorch module. y is (batch, dim) in its natural layout."""
    del t
    w1t, b1, w2t, b2, w3t, b3 = params
    batch, dim = y.shape
    assert dim == w1t.shape[0], "state dim mismatch with W1^T"

    pb, bm, steps = _tiling(batch)
    # Only pad if the batch is ragged w.r.t. the tile (demo path: no pad, no extra ops).
    y_in = y if pb == batch else jnp.pad(y, ((0, pb - batch), (0, 0)))

    def const(shape):
        # Grid-invariant parameter: same block every step -> stays VMEM-resident.
        return pl.BlockSpec(shape, lambda i: (0, 0))

    out = pl.pallas_call(
        odefunc_kernel,
        out_shape=jax.ShapeDtypeStruct((pb, dim), y.dtype),
        grid_spec=pltpu.PrefetchScalarGridSpec(
            num_scalar_prefetch=0,
            grid=(steps,),
            in_specs=[
                pl.BlockSpec((bm, dim), lambda i: (i, 0)),   # y tile, natural layout
                const(w1t.shape), const(b1.shape),
                const(w2t.shape), const(b2.shape),
                const(w3t.shape), const(b3.shape),
            ],
            out_specs=pl.BlockSpec((bm, dim), lambda i: (i, 0)),
        ),
        compiler_params=pltpu.CompilerParams(
            dimension_semantics=("parallel",),   # batch tiles shard across TCs (v7x)
        ),
    )(y_in, w1t, b1, w2t, b2, w3t, b3)

    return out if pb == batch else out[:batch]


def init_torch_params(key, dim, hidden=HIDDEN, dtype=jnp.float32):
    """PyTorch-layout params with the module's init: W ~ N(0, 0.1), (out, in); b = 0."""
    k1, k2, k3 = jax.random.split(key, 3)
    w1 = (0.1 * jax.random.normal(k1, (hidden, dim))).astype(dtype)
    w2 = (0.1 * jax.random.normal(k2, (hidden, hidden))).astype(dtype)
    w3 = (0.1 * jax.random.normal(k3, (dim, hidden))).astype(dtype)
    return (w1, jnp.zeros((hidden,), dtype),
            w2, jnp.zeros((hidden,), dtype),
            w3, jnp.zeros((dim,), dtype))


def prepare_params(torch_params, compute_dtype=jnp.bfloat16, hidden_pad=HIDDEN_PAD):
    """One-time host-side prep (outside the integration loop): transpose weights to
    (in, out), zero-pad hidden 50->64, cast matmul operands to compute_dtype.
    Biases stay f32 (bias add / tanh run in f32 on the VPU/EUP)."""
    w1, b1, w2, b2, w3, b3 = torch_params
    hidden, dim = w1.shape
    hp = hidden_pad - hidden
    w1t = jnp.pad(w1.T, ((0, 0), (0, hp))).astype(compute_dtype)            # (dim, 64)
    w2t = jnp.pad(w2.T, ((0, hp), (0, hp))).astype(compute_dtype)           # (64, 64)
    w3t = jnp.pad(w3.T, ((0, hp), (0, 0))).astype(compute_dtype)            # (64, dim)
    b1p = jnp.pad(b1, (0, hp)).astype(jnp.float32).reshape(1, hidden_pad)   # (1, 64)
    b2p = jnp.pad(b2, (0, hp)).astype(jnp.float32).reshape(1, hidden_pad)   # (1, 64)
    b3p = b3.astype(jnp.float32).reshape(1, dim)                            # (1, dim)
    return (w1t, b1p, w2t, b2p, w3t, b3p)


def odefunc_reference(t, y, torch_params):
    del t
    w1, b1, w2, b2, w3, b3 = torch_params
    h1 = jnp.tanh(y @ w1.T + b1)
    h2 = jnp.tanh(h1 @ w2.T + b2)
    return h2 @ w3.T + b3


if __name__ == "__main__":
    key = jax.random.PRNGKey(0)
    kp, ky = jax.random.split(key)

    dim, batch = DIM, 8   # small demo shapes; wrapper handles arbitrary (ragged) batches
    torch_params = init_torch_params(kp, dim)
    y = jax.random.normal(ky, (batch, dim), jnp.float32)
    t = jnp.float32(0.0)  # unused, kept for API parity with forward(t, y)

    ref = odefunc_reference(t, y, torch_params)

    # Full-precision path (closely matches the f32 PyTorch module).
    params_f32 = prepare_params(torch_params, compute_dtype=jnp.float32)
    out_f32 = jax.block_until_ready(odefunc_forward(t, y, params_f32))
    assert out_f32.shape == (batch, dim)
    assert jnp.allclose(out_f32, ref, atol=1e-4, rtol=1e-4), "f32 kernel mismatch"

    # Default fast path: bf16 MXU operands, f32 accumulation / bias / tanh.
    params_bf16 = prepare_params(torch_params, compute_dtype=jnp.bfloat16)
    out_bf16 = jax.block_until_ready(odefunc_forward(t, y, params_bf16))
    assert out_bf16.shape == (batch, dim)
    assert jnp.allclose(out_bf16, ref, atol=3e-2, rtol=0), "bf16 kernel mismatch"

    print("KERNEL_OK")
</pallas_src>

<mosaic_0001>
module attributes {stable_mosaic.version = 11 : i64} {
  func.func @odefunc_kernel(%arg0: i32, %arg1: memref<8x32xf32, #tpu.memory_space<vmem>>, %arg2: memref<32x64xf32, #tpu.memory_space<vmem>>, %arg3: memref<1x64xf32, #tpu.memory_space<vmem>>, %arg4: memref<64x64xf32, #tpu.memory_space<vmem>>, %arg5: memref<1x64xf32, #tpu.memory_space<vmem>>, %arg6: memref<64x32xf32, #tpu.memory_space<vmem>>, %arg7: memref<1x32xf32, #tpu.memory_space<vmem>>, %arg8: memref<8x32xf32, #tpu.memory_space<vmem>>) attributes {dimension_semantics = [#tpu.dimension_semantics<parallel>], iteration_bounds = array<i64: 1>, scalar_prefetch = 0 : i64, scratch_operands = 0 : i64, tpu.core_type = #tpu.core_type<tc>, window_params = [{transform_indices = @transform_0, window_bounds = array<i64: 8, 32>}, {pipeline_mode = #tpu.pipeline_mode<synchronous>, transform_indices = @transform_1, window_bounds = array<i64: 32, 64>}, {pipeline_mode = #tpu.pipeline_mode<synchronous>, transform_indices = @transform_2, window_bounds = array<i64: 1, 64>}, {pipeline_mode = #tpu.pipeline_mode<synchronous>, transform_indices = @transform_3, window_bounds = array<i64: 64, 64>}, {pipeline_mode = #tpu.pipeline_mode<synchronous>, transform_indices = @transform_4, window_bounds = array<i64: 1, 64>}, {pipeline_mode = #tpu.pipeline_mode<synchronous>, transform_indices = @transform_5, window_bounds = array<i64: 64, 32>}, {pipeline_mode = #tpu.pipeline_mode<synchronous>, transform_indices = @transform_6, window_bounds = array<i64: 1, 32>}, {transform_indices = @transform_7, window_bounds = array<i64: 8, 32>}]} {
    %c0 = arith.constant 0 : index
    %c0_0 = arith.constant 0 : index
    %0 = vector.load %arg1[%c0, %c0_0] : memref<8x32xf32, #tpu.memory_space<vmem>>, vector<8x32xf32>
    %c0_1 = arith.constant 0 : index
    %c0_2 = arith.constant 0 : index
    %1 = vector.load %arg2[%c0_1, %c0_2] : memref<32x64xf32, #tpu.memory_space<vmem>>, vector<32x64xf32>
    %cst = arith.constant dense<0.000000e+00> : vector<8x64xf32>
    %2 = tpu.matmul %0, %1, %cst {dimension_numbers = #tpu.dot_dimension_numbers<[1], [0], [0], [1], [0, 0, 1, 1], [], []>} : vector<8x32xf32>, vector<32x64xf32>, vector<8x64xf32> -> vector<8x64xf32>
    %c0_3 = arith.constant 0 : index
    %c0_4 = arith.constant 0 : index
    %3 = vector.load %arg3[%c0_3, %c0_4] : memref<1x64xf32, #tpu.memory_space<vmem>>, vector<1x64xf32>
    %4 = vector.broadcast %3 : vector<1x64xf32> to vector<8x64xf32>
    %5 = arith.addf %2, %4 : vector<8x64xf32>
    %6 = math.tanh %5 : vector<8x64xf32>
    %c0_5 = arith.constant 0 : index
    %c0_6 = arith.constant 0 : index
    %7 = vector.load %arg4[%c0_5, %c0_6] : memref<64x64xf32, #tpu.memory_space<vmem>>, vector<64x64xf32>
    %cst_7 = arith.constant dense<0.000000e+00> : vector<8x64xf32>
    %8 = tpu.matmul %6, %7, %cst_7 {dimension_numbers = #tpu.dot_dimension_numbers<[1], [0], [0], [1], [0, 0, 1, 1], [], []>} : vector<8x64xf32>, vector<64x64xf32>, vector<8x64xf32> -> vector<8x64xf32>
    %c0_8 = arith.constant 0 : index
    %c0_9 = arith.constant 0 : index
    %9 = vector.load %arg5[%c0_8, %c0_9] : memref<1x64xf32, #tpu.memory_space<vmem>>, vector<1x64xf32>
    %10 = vector.broadcast %9 : vector<1x64xf32> to vector<8x64xf32>
    %11 = arith.addf %8, %10 : vector<8x64xf32>
    %12 = math.tanh %11 : vector<8x64xf32>
    %c0_10 = arith.constant 0 : index
    %c0_11 = arith.constant 0 : index
    %13 = vector.load %arg6[%c0_10, %c0_11] : memref<64x32xf32, #tpu.memory_space<vmem>>, vector<64x32xf32>
    %cst_12 = arith.constant dense<0.000000e+00> : vector<8x32xf32>
    %14 = tpu.matmul %12, %13, %cst_12 {dimension_numbers = #tpu.dot_dimension_numbers<[1], [0], [0], [1], [0, 0, 1, 1], [], []>} : vector<8x64xf32>, vector<64x32xf32>, vector<8x32xf32> -> vector<8x32xf32>
    %c0_13 = arith.constant 0 : index
    %c0_14 = arith.constant 0 : index
    %15 = vector.load %arg7[%c0_13, %c0_14] : memref<1x32xf32, #tpu.memory_space<vmem>>, vector<1x32xf32>
    %16 = vector.broadcast %15 : vector<1x32xf32> to vector<8x32xf32>
    %17 = arith.addf %14, %16 : vector<8x32xf32>
    %c0_15 = arith.constant 0 : index
    %c0_16 = arith.constant 0 : index
    %18 = vector.load %arg8[%c0_15, %c0_16] : memref<8x32xf32, #tpu.memory_space<vmem>>, vector<8x32xf32>
    tpu.vector_store %arg8[%c0_15, %c0_16], %17 {strides = array<i32>} : memref<8x32xf32, #tpu.memory_space<vmem>>, vector<8x32xf32>,
    return
  }
  func.func @transform_0(%arg0: i32) -> (i32, i32) {
    %c0_i32 = arith.constant 0 : i32
    %c0_i32_0 = arith.constant 0 : i32
    return %arg0, %c0_i32 : i32, i32
  }
  func.func @transform_1(%arg0: i32) -> (i32, i32) {
    %c0_i32 = arith.constant 0 : i32
    %c0_i32_0 = arith.constant 0 : i32
    %c0_i32_1 = arith.constant 0 : i32
    return %c0_i32, %c0_i32_0 : i32, i32
  }
  func.func @transform_2(%arg0: i32) -> (i32, i32) {
    %c0_i32 = arith.constant 0 : i32
    %c0_i32_0 = arith.constant 0 : i32
    %c0_i32_1 = arith.constant 0 : i32
    return %c0_i32, %c0_i32_0 : i32, i32
  }
  func.func @transform_3(%arg0: i32) -> (i32, i32) {
    %c0_i32 = arith.constant 0 : i32
    %c0_i32_0 = arith.constant 0 : i32
    %c0_i32_1 = arith.constant 0 : i32
    return %c0_i32, %c0_i32_0 : i32, i32
  }
  func.func @transform_4(%arg0: i32) -> (i32, i32) {
    %c0_i32 = arith.constant 0 : i32
    %c0_i32_0 = arith.constant 0 : i32
    %c0_i32_1 = arith.constant 0 : i32
    return %c0_i32, %c0_i32_0 : i32, i32
  }
  func.func @transform_5(%arg0: i32) -> (i32, i32) {
    %c0_i32 = arith.constant 0 : i32
    %c0_i32_0 = arith.constant 0 : i32
    %c0_i32_1 = arith.constant 0 : i32
    return %c0_i32, %c0_i32_0 : i32, i32
  }
  func.func @transform_6(%arg0: i32) -> (i32, i32) {
    %c0_i32 = arith.constant 0 : i32
    %c0_i32_0 = arith.constant 0 : i32
    %c0_i32_1 = arith.constant 0 : i32
    return %c0_i32, %c0_i32_0 : i32, i32
  }
  func.func @transform_7(%arg0: i32) -> (i32, i32) {
    %c0_i32 = arith.constant 0 : i32
    %c0_i32_0 = arith.constant 0 : i32
    return %arg0, %c0_i32 : i32, i32
  }
}

</mosaic_0001>

<llo_original>
// kernel: tpu_custom_call.1
$region0: #{tpu_custom_call.1}
  #allocation0 [shape = 'u32[]', space=smem, size = 0x4, offset = 0x4, fixed_abs, tag = 'smem constant byte address 0x4 - core index']
  #allocation1 [shape = 'u32[144,128]{1,0:T(1,128)}', space=vmem, size = 0x12000, scoped, tag = 'internal scratch']
  %s0 = inlined_call_operand.hbm [shape: f32[8,32], index: 0, kind: input, shape index: {}]
  %s1 = inlined_call_operand.vmem [shape: f32[32,64], index: 1, kind: input, shape index: {}]
  %s2 = inlined_call_operand.vmem [shape: f32[1,64], index: 2, kind: input, shape index: {}]
  %s3 = inlined_call_operand.vmem [shape: f32[64,64], index: 3, kind: input, shape index: {}]
  %s4 = inlined_call_operand.vmem [shape: f32[1,64], index: 4, kind: input, shape index: {}]
  %s5 = inlined_call_operand.vmem [shape: f32[64,32], index: 5, kind: input, shape index: {}]
  %s6 = inlined_call_operand.vmem [shape: f32[1,32], index: 6, kind: input, shape index: {}]
  %s7 = inlined_call_operand.hbm [shape: f32[8,32], index: 7, kind: output, shape index: {}]
  %s8 = sld [smem:[#allocation0]]
  $region42: #{tpu_custom_call.1} parent=0
    _
  %s10 = ssub.s32 1, %s8
  %s11 = scalar_select 0, %s10, %s8
  $region1: #{tpu_custom_call.1} parent=0
    #allocation2 [shape = 'u8[4096]{0}', space=vmem, size = 0x1000, scoped, tag = 'input window, operand 0, single buffered']
    #allocation3 [shape = 's32[1]{0}', space=sflag, size = 0x4, scoped, tag = 'scoped memory for tpu_custom_call.1']
    #allocation4 [shape = 's32[1]{0}', space=sflag, size = 0x4, scoped, tag = 'scoped memory for tpu_custom_call.1']
    #allocation5 [shape = 'u8[4096]{0}', space=vmem, size = 0x1000, scoped, tag = 'output window, operand 0, single buffered']
    %12 = vsyncpa [#allocation3], 0
    %13 = vsyncpa [#allocation4], 0
    // Predicated region
    $region2: #{tpu_custom_call.1} parent=1 // pred_check
      _
    $region3: #{tpu_custom_call.1} parent=1 // pred_check_branch
      %15 = sbr.rel (0) target = $region5
    $region4: #{tpu_custom_call.1} parent=1 // pred_region
      %s17 = ssub.s32 128, 128
      %18 = vsyncadd [#allocation3], %s17
      %s20 = sshll.u32 [#allocation2], 4
      %s21 = int_to_ptr.vmem [resolvable:$true] %s20
      %23 = dma.hbm_to_vmem [thread:$0]  %s0, 128, %s21, [#allocation3]
    $region5: #{tpu_custom_call.1} parent=1 // pred_fallthru
      _
    // Predicated region
    $region6: #{tpu_custom_call.1} parent=1 // pred_check
      _
    $region7: #{tpu_custom_call.1} parent=1 // pred_check_branch
      %25 = sbr.rel (0) target = $region9
    $region8: #{tpu_custom_call.1} parent=1 // pred_region
      _
    $region9: #{tpu_custom_call.1} parent=1 // pred_fallthru
      _
    // Predicated region
    $region10: #{tpu_custom_call.1} parent=1 // pred_check
      _
    $region11: #{tpu_custom_call.1} parent=1 // pred_check_branch
      %27 = sbr.rel (0) target = $region13
    $region12: #{tpu_custom_call.1} parent=1 // pred_region
      _
    $region13: #{tpu_custom_call.1} parent=1 // pred_fallthru
      _
    // Predicated region
    $region14: #{tpu_custom_call.1} parent=1 // pred_check
      _
    $region15: #{tpu_custom_call.1} parent=1 // pred_check_branch
      %29 = sbr.rel (0) target = $region17
    $region16: #{tpu_custom_call.1} parent=1 // pred_region
      _
    $region17: #{tpu_custom_call.1} parent=1 // pred_fallthru
      _
    // Predicated region
    $region18: #{tpu_custom_call.1} parent=1 // pred_check
      _
    $region19: #{tpu_custom_call.1} parent=1 // pred_check_branch
      %31 = sbr.rel (0) target = $region21
    $region20: #{tpu_custom_call.1} parent=1 // pred_region
      _
    $region21: #{tpu_custom_call.1} parent=1 // pred_fallthru
      _
    // Predicated region
    $region22: #{tpu_custom_call.1} parent=1 // pred_check
      _
    $region23: #{tpu_custom_call.1} parent=1 // pred_check_branch
      %33 = sbr.rel (0) target = $region25
    $region24: #{tpu_custom_call.1} parent=1 // pred_region
      _
    $region25: #{tpu_custom_call.1} parent=1 // pred_fallthru
      _
    // Predicated region
    $region26: #{tpu_custom_call.1} parent=1 // pred_check
      _
    $region27: #{tpu_custom_call.1} parent=1 // pred_check_branch
      %35 = sbr.rel (0) target = $region29
    $region28: #{tpu_custom_call.1} parent=1 // pred_region
      _
    $region29: #{tpu_custom_call.1} parent=1 // pred_fallthru
      _
    // Predicated region
    $region30: #{tpu_custom_call.1} parent=1 // pred_check
      _
    $region31: #{tpu_custom_call.1} parent=1 // pred_check_branch
      %37 = sbr.rel (0) target = $region33
    $region32: #{tpu_custom_call.1} parent=1 // pred_region
      %38 = dma.done [#allocation3], 128
    $region33: #{tpu_custom_call.1} parent=1 // pred_fallthru
      _
    %v39 = vld [vmem:[#allocation2] sm:$0xff]
    %v40 = vld [vmem:[%s1] sm:$0xff]
    %v41 = vld [vmem:[%s1 + $0x8] sm:$0xff]
    %v42 = vld [vmem:[%s1 + $0x10] sm:$0xff]
    %v43 = vld [vmem:[%s1 + $0x18] sm:$0xff]
    %v44 = vld [vmem:[%s2] sm:$0x1]
    %v46 = vlaneseq
    %v47 = vshrl.u32 %v46, 7
    %v48 = vsub.s32 0, %v47
    %v49 = vrot.slane %v44, %v48
    %vm51 = vcmask 261120
    %v53 = vsel %vm51, %v39, 0
    %55 = vmatprep.subr.mxu0 0.0
    %56 = vmatpush1.msra.mxu0 0.0
    %57 = vmatprep.subr.mxu0 0.0
    %58 = vmatpush1.msra.mxu0 0.0
    %59 = vmatprep.subr.mxu0 0.0
    %60 = vmatpush1.msra.mxu0 0.0
    %61 = vmatprep.subr.mxu0 0.0
    %62 = vmatpush1.msra.mxu0 0.0
    %63 = vmatprep.subr.mxu0 0.0
    %64 = vmatpush1.msra.mxu0 0.0
    %65 = vmatprep.subr.mxu0 0.0
    %66 = vmatpush1.msra.mxu0 0.0
    %67 = vmatprep.subr.mxu0 0.0
    %68 = vmatpush1.msra.mxu0 0.0
    %69 = vmatprep.subr.mxu0 0.0
    %70 = vmatpush1.msra.mxu0 0.0
    %71 = vmatprep.subr.mxu0 0.0
    %72 = vmatpush1.msra.mxu0 0.0
    %73 = vmatprep.subr.mxu0 0.0
    %74 = vmatpush1.msra.mxu0 0.0
    %75 = vmatprep.subr.mxu0 0.0
    %76 = vmatpush1.msra.mxu0 0.0
    %77 = vmatprep.subr.mxu0 0.0
    %78 = vmatpush1.msra.mxu0 0.0
    %79 = vmatprep.subr.mxu0 0.0
    %80 = vmatpush1.msra.mxu0 %v43
    %81 = vmatprep.subr.mxu0 0.0
    %82 = vmatpush1.msra.mxu0 %v42
    %83 = vmatprep.subr.mxu0 0.0
    %84 = vmatpush1.msra.mxu0 %v41
    %85 = vmatprep.subr.mxu0 0.0
    %86 = vmatpush1.msra.mxu0 %v40
    %87 = vmatprep.subr.mxu0 0.0
    %88 = vmatpush2.msra.mxu0 0.0
    %89 = vmatprep.subr.mxu0 0.0
    %90 = vmatpush2.msra.mxu0 0.0
    %91 = vmatprep.subr.mxu0 0.0
    %92 = vmatpush2.msra.mxu0 0.0
    %93 = vmatprep.subr.mxu0 0.0
    %94 = vmatpush2.msra.mxu0 0.0
    %95 = vmatprep.subr.mxu0 0.0
    %96 = vmatpush2.msra.mxu0 0.0
    %97 = vmatprep.subr.mxu0 0.0
    %98 = vmatpush2.msra.mxu0 0.0
    %99 = vmatprep.subr.mxu0 0.0
    %100 = vmatpush2.msra.mxu0 0.0
    %101 = vmatprep.subr.mxu0 0.0
    %102 = vmatpush2.msra.mxu0 0.0
    %103 = vmatprep.subr.mxu0 0.0
    %104 = vmatpush2.msra.mxu0 0.0
    %105 = vmatprep.subr.mxu0 0.0
    %106 = vmatpush2.msra.mxu0 0.0
    %107 = vmatprep.subr.mxu0 0.0
    %108 = vmatpush2.msra.mxu0 0.0
    %109 = vmatprep.subr.mxu0 0.0
    %110 = vmatpush2.msra.mxu0 0.0
    %111 = vmatprep.subr.mxu0 0.0
    %112 = vmatpush2.msra.mxu0 0.0
    %113 = vmatprep.subr.mxu0 0.0
    %114 = vmatpush2.msra.mxu0 0.0
    %115 = vmatprep.subr.mxu0 0.0
    %116 = vmatpush2.msra.mxu0 0.0
    %117 = vmatprep.subr.mxu0 0.0
    %118 = vmatpush2.msra.mxu0 0.0
    %119 = vmatprep.mubr.f32.mxu0 0.0
    %120 = vmatmul.mubr.f32.gmra.mxu0 %v53
    %v121 = vpop.f32.mrf.mxu0
    %v122 = vadd.f32 %v49, %v121
    %v123 = vpop.f32.mrf.mxu0
    %124 = vdwg.mxu0
    %v125 = vtanh.pop %v122
    %v126 = vld [vmem:[%s3] sm:$0xff]
    %v127 = vld [vmem:[%s3 + $0x8] sm:$0xff]
    %v128 = vld [vmem:[%s3 + $0x10] sm:$0xff]
    %v129 = vld [vmem:[%s3 + $0x18] sm:$0xff]
    %v130 = vld [vmem:[%s3 + $0x20] sm:$0xff]
    %v131 = vld [vmem:[%s3 + $0x28] sm:$0xff]
    %v132 = vld [vmem:[%s3 + $0x30] sm:$0xff]
    %v133 = vld [vmem:[%s3 + $0x38] sm:$0xff]
    %v134 = vld [vmem:[%s4] sm:$0x1]
    %v136 = vlaneseq
    %v137 = vshrl.u32 %v136, 7
    %v138 = vsub.s32 0, %v137
    %v139 = vrot.slane %v134, %v138
    %vm141 = vcmask 523264
    %v143 = vsel %vm141, %v125, 0
    %145 = vmatprep.subr.mxu0 0.0
    %146 = vmatpush1.msra.mxu0 0.0
    %147 = vmatprep.subr.mxu0 0.0
    %148 = vmatpush1.msra.mxu0 0.0
    %149 = vmatprep.subr.mxu0 0.0
    %150 = vmatpush1.msra.mxu0 0.0
    %151 = vmatprep.subr.mxu0 0.0
    %152 = vmatpush1.msra.mxu0 0.0
    %153 = vmatprep.subr.mxu0 0.0
    %154 = vmatpush1.msra.mxu0 0.0
    %155 = vmatprep.subr.mxu0 0.0
    %156 = vmatpush1.msra.mxu0 0.0
    %157 = vmatprep.subr.mxu0 0.0
    %158 = vmatpush1.msra.mxu0 0.0
    %159 = vmatprep.subr.mxu0 0.0
    %160 = vmatpush1.msra.mxu0 0.0
    %161 = vmatprep.subr.mxu0 0.0
    %162 = vmatpush1.msra.mxu0 %v133
    %163 = vmatprep.subr.mxu0 0.0
    %164 = vmatpush1.msra.mxu0 %v132
    %165 = vmatprep.subr.mxu0 0.0
    %166 = vmatpush1.msra.mxu0 %v131
    %167 = vmatprep.subr.mxu0 0.0
    %168 = vmatpush1.msra.mxu0 %v130
    %169 = vmatprep.subr.mxu0 0.0
    %170 = vmatpush1.msra.mxu0 %v129
    %171 = vmatprep.subr.mxu0 0.0
    %172 = vmatpush1.msra.mxu0 %v128
    %173 = vmatprep.subr.mxu0 0.0
    %174 = vmatpush1.msra.mxu0 %v127
    %175 = vmatprep.subr.mxu0 0.0
    %176 = vmatpush1.msra.mxu0 %v126
    %177 = vmatprep.subr.mxu0 0.0
    %178 = vmatpush2.msra.mxu0 0.0
    %179 = vmatprep.subr.mxu0 0.0
    %180 = vmatpush2.msra.mxu0 0.0
    %181 = vmatprep.subr.mxu0 0.0
    %182 = vmatpush2.msra.mxu0 0.0
    %183 = vmatprep.subr.mxu0 0.0
    %184 = vmatpush2.msra.mxu0 0.0
    %185 = vmatprep.subr.mxu0 0.0
    %186 = vmatpush2.msra.mxu0 0.0
    %187 = vmatprep.subr.mxu0 0.0
    %188 = vmatpush2.msra.mxu0 0.0
    %189 = vmatprep.subr.mxu0 0.0
    %190 = vmatpush2.msra.mxu0 0.0
    %191 = vmatprep.subr.mxu0 0.0
    %192 = vmatpush2.msra.mxu0 0.0
    %193 = vmatprep.subr.mxu0 0.0
    %194 = vmatpush2.msra.mxu0 0.0
    %195 = vmatprep.subr.mxu0 0.0
    %196 = vmatpush2.msra.mxu0 0.0
    %197 = vmatprep.subr.mxu0 0.0
    %198 = vmatpush2.msra.mxu0 0.0
    %199 = vmatprep.subr.mxu0 0.0
    %200 = vmatpush2.msra.mxu0 0.0
    %201 = vmatprep.subr.mxu0 0.0
    %202 = vmatpush2.msra.mxu0 0.0
    %203 = vmatprep.subr.mxu0 0.0
    %204 = vmatpush2.msra.mxu0 0.0
    %205 = vmatprep.subr.mxu0 0.0
    %206 = vmatpush2.msra.mxu0 0.0
    %207 = vmatprep.subr.mxu0 0.0
    %208 = vmatpush2.msra.mxu0 0.0
    %209 = vmatprep.mubr.f32.mxu0 0.0
    %210 = vmatmul.mubr.f32.gmra.mxu0 %v143
    %v211 = vpop.f32.mrf.mxu0
    %v212 = vadd.f32 %v139, %v211
    %v213 = vpop.f32.mrf.mxu0
    %214 = vdwg.mxu0
    %v215 = vtanh.pop %v212
    %v216 = vld [vmem:[%s5] sm:$0xff]
    %v217 = vld [vmem:[%s5 + $0x8] sm:$0xff]
    %v218 = vld [vmem:[%s5 + $0x10] sm:$0xff]
    %v219 = vld [vmem:[%s5 + $0x18] sm:$0xff]
    %v220 = vld [vmem:[%s5 + $0x20] sm:$0xff]
    %v221 = vld [vmem:[%s5 + $0x28] sm:$0xff]
    %v222 = vld [vmem:[%s5 + $0x30] sm:$0xff]
    %v223 = vld [vmem:[%s5 + $0x38] sm:$0xff]
    %v224 = vld [vmem:[%s6] sm:$0x1]
    %v226 = vlaneseq
    %v227 = vshrl.u32 %v226, 7
    %v228 = vsub.s32 0, %v227
    %v229 = vrot.slane %v224, %v228
    %v232 = vsel %vm141, %v215, 0
    %234 = vmatprep.subr.mxu0 0.0
    %235 = vmatpush1.msra.mxu0 0.0
    %236 = vmatprep.subr.mxu0 0.0
    %237 = vmatpush1.msra.mxu0 0.0
    %238 = vmatprep.subr.mxu0 0.0
    %239 = vmatpush1.msra.mxu0 0.0
    %240 = vmatprep.subr.mxu0 0.0
    %241 = vmatpush1.msra.mxu0 0.0
    %242 = vmatprep.subr.mxu0 0.0
    %243 = vmatpush1.msra.mxu0 0.0
    %244 = vmatprep.subr.mxu0 0.0
    %245 = vmatpush1.msra.mxu0 0.0
    %246 = vmatprep.subr.mxu0 0.0
    %247 = vmatpush1.msra.mxu0 0.0
    %248 = vmatprep.subr.mxu0 0.0
    %249 = vmatpush1.msra.mxu0 0.0
    %250 = vmatprep.subr.mxu0 0.0
    %251 = vmatpush1.msra.mxu0 %v223
    %252 = vmatprep.subr.mxu0 0.0
    %253 = vmatpush1.msra.mxu0 %v222
    %254 = vmatprep.subr.mxu0 0.0
    %255 = vmatpush1.msra.mxu0 %v221
    %256 = vmatprep.subr.mxu0 0.0
    %257 = vmatpush1.msra.mxu0 %v220
    %258 = vmatprep.subr.mxu0 0.0
    %259 = vmatpush1.msra.mxu0 %v219
    %260 = vmatprep.subr.mxu0 0.0
    %261 = vmatpush1.msra.mxu0 %v218
    %262 = vmatprep.subr.mxu0 0.0
    %263 = vmatpush1.msra.mxu0 %v217
    %264 = vmatprep.subr.mxu0 0.0
    %265 = vmatpush1.msra.mxu0 %v216
    %266 = vmatprep.subr.mxu0 0.0
    %267 = vmatpush2.msra.mxu0 0.0
    %268 = vmatprep.subr.mxu0 0.0
    %269 = vmatpush2.msra.mxu0 0.0
    %270 = vmatprep.subr.mxu0 0.0
    %271 = vmatpush2.msra.mxu0 0.0
    %272 = vmatprep.subr.mxu0 0.0
    %273 = vmatpush2.msra.mxu0 0.0
    %274 = vmatprep.subr.mxu0 0.0
    %275 = vmatpush2.msra.mxu0 0.0
    %276 = vmatprep.subr.mxu0 0.0
    %277 = vmatpush2.msra.mxu0 0.0
    %278 = vmatprep.subr.mxu0 0.0
    %279 = vmatpush2.msra.mxu0 0.0
    %280 = vmatprep.subr.mxu0 0.0
    %281 = vmatpush2.msra.mxu0 0.0
    %282 = vmatprep.subr.mxu0 0.0
    %283 = vmatpush2.msra.mxu0 0.0
    %284 = vmatprep.subr.mxu0 0.0
    %285 = vmatpush2.msra.mxu0 0.0
    %286 = vmatprep.subr.mxu0 0.0
    %287 = vmatpush2.msra.mxu0 0.0
    %288 = vmatprep.subr.mxu0 0.0
    %289 = vmatpush2.msra.mxu0 0.0
    %290 = vmatprep.subr.mxu0 0.0
    %291 = vmatpush2.msra.mxu0 0.0
    %292 = vmatprep.subr.mxu0 0.0
    %293 = vmatpush2.msra.mxu0 0.0
    %294 = vmatprep.subr.mxu0 0.0
    %295 = vmatpush2.msra.mxu0 0.0
    %296 = vmatprep.subr.mxu0 0.0
    %297 = vmatpush2.msra.mxu0 0.0
    %298 = vmatprep.mubr.f32.mxu0 0.0
    %299 = vmatmul.mubr.f32.gmra.mxu0 %v232
    %v300 = vpop.f32.mrf.mxu0
    %v301 = vadd.f32 %v229, %v300
    %v302 = vpop.f32.mrf.mxu0
    %303 = vdwg.mxu0
    %304 = vst.msk [vmem:[#allocation5] sm:$0xff] %vm51, %v301
    // Predicated region
    $region34: #{tpu_custom_call.1} parent=1 // pred_check
      _
    $region35: #{tpu_custom_call.1} parent=1 // pred_check_branch
      %306 = sbr.rel (0) target = $region37
    $region36: #{tpu_custom_call.1} parent=1 // pred_region
      %s308 = ssub.s32 128, 128
      %309 = vsyncadd [#allocation4], %s308
      %s311 = sshll.u32 [#allocation5], 4
      %s312 = int_to_ptr.vmem [resolvable:$true] %s311
      %314 = dma.vmem_to_hbm [thread:$0]  %s312, 128, %s7, [#allocation4]
    $region37: #{tpu_custom_call.1} parent=1 // pred_fallthru
      _
    // Predicated region
    $region38: #{tpu_custom_call.1} parent=1 // pred_check
      _
    $region39: #{tpu_custom_call.1} parent=1 // pred_check_branch
      %316 = sbr.rel (0) target = $region41
    $region40: #{tpu_custom_call.1} parent=1 // pred_region
      %317 = dma.done [#allocation4], 128
    $region41: #{tpu_custom_call.1} parent=1 // pred_fallthru
      _
    %318 = vsyncpa [#allocation3], 1
    %319 = vsyncpa [#allocation4], 1

</llo_original>
